<compile_context>
chip_gen: v7x
topology: tpu7x:2x2x1
jax: 0.10.0
libtpu: 0.0.40
codegen_flags: <defaults>
</compile_context>

<pallas_src>
import math

import jax
import jax.numpy as jnp
from jax.experimental import pallas as pl
from jax.experimental.pallas import tpu as pltpu

_TILE_BYTES = 8 * 1024 * 1024          # per-buffer target (out tile + x tile)
_VMEM_LIMIT_BYTES = 32 * 1024 * 1024   # >= 2x(out + x + C) double-buffered


def _round_up(x, m):
    return (x + m - 1) // m * m


def _cdiv(a, b):
    return -(-a // b)


def _softplus(v):
    # Numerically stable softplus, matches torch.nn.Softplus (beta=1).
    return jnp.maximum(v, 0.0) + jnp.log1p(jnp.exp(-jnp.abs(v)))


def _coefficient_table(weight):
    """C[k, 3*i + j] = wBlock_i[k, j]; shape (3, 3*nIntPts), float32."""
    w = weight.astype(jnp.float32)
    a = _softplus(w[:, 0])
    b = w[:, 1]
    c = w[:, 2]
    d = _softplus(w[:, 3])
    e = w[:, 4]
    f = _softplus(w[:, 5])
    # wBlock = A^T A (symmetric 3x3).
    b00 = a * a
    b01 = a * b
    b02 = a * c
    b11 = b * b + d * d
    b12 = b * c + d * e
    b22 = c * c + e * e + f * f
    rows = jnp.stack(
        [jnp.stack([b00, b01, b02], axis=-1),   # wBlock row 0
         jnp.stack([b01, b11, b12], axis=-1),   # wBlock row 1
         jnp.stack([b02, b12, b22], axis=-1)],  # wBlock row 2
        axis=0)                                  # (3, nIntPts, 3)
    return rows.reshape(3, -1)                   # (3, 3*nIntPts), col = 3*i + j


def _choose_tiles(batch, width, itemsize):
    """Pick (batch_tile, lane_tile) for a (batch, width) output.

    Lane tile: multiple of 128 (unmasked stores) or the full width.
    Batch tile: multiple of the packed sublane granularity, or the full batch.
    The VMEM-padded (out + x) tile targets ~_TILE_BYTES independent of the
    batch tile.  Edge tiles may be partial; OOB rows/lanes are clamped by DMA.
    """
    sub = max(8, 32 // itemsize)                 # packed sublane granularity
    # Lane tile width from the byte budget at a moderate batch tile.
    tb0 = min(_round_up(batch, sub), 256)
    lane_cap = max(128, ((_TILE_BYTES // (tb0 * itemsize)) - 128) // 128 * 128)
    if width <= lane_cap:
        lane = width                              # full width, one lane tile
    else:
        n_lt = _cdiv(width, lane_cap)
        lane = min(lane_cap, _round_up(_cdiv(width, n_lt), 128))
    # Batch tile: spend the remaining budget on rows, balanced across tiles.
    per_row = (_round_up(lane, 128) + 128) * itemsize   # out row + x row (padded)
    if batch <= sub:
        tb = batch                                # full batch dim, one tile
    else:
        tb_max = min(max(sub, (_TILE_BYTES // per_row) // sub * sub),
                     (batch // sub) * sub)
        n_bt = _cdiv(batch, tb_max)
        tb = min(tb_max, _round_up(_cdiv(batch, n_bt), sub))
    return tb, lane


def _block_layer_kernel(x_ref, c_ref, out_ref):
    """One (TB, L) interleaved output tile: out[b, p] = sum_k x[b, k] * C[k, p].

    x_ref:   (TB, 3)  batch tile (any float dtype)
    c_ref:   (3, L)   float32 per-column coefficients
    out_ref: (TB, L)  output tile, column p = 3*i + j
    """
    x = x_ref[...].astype(jnp.float32)
    c = c_ref[...]
    out = (x[:, 0:1] * c[0:1, :]
           + x[:, 1:2] * c[1:2, :]
           + x[:, 2:3] * c[2:3, :])
    out_ref[...] = out.astype(out_ref.dtype)


def block_layer(x, weight):
    """Pallas implementation of blockLayer.forward (bias=False).

    x:      (B, 3) or (3,)
    weight: (nIntPts, 6)
    returns (B, 3*nIntPts) or (3*nIntPts,)
    """
    squeeze = x.ndim == 1
    if squeeze:
        x = x[None, :]
    B, in_features = x.shape
    assert in_features == 3, "blockLayer forward requires in_features == 3"
    n_int_pts, n_params = weight.shape
    assert n_params == 6, "blockLayer weight must have shape (nIntPts, 6)"
    out_dtype = x.dtype
    width = 3 * n_int_pts

    # Tiny O(nIntPts) XLA precompute of the interleaved coefficient table.
    coeff = _coefficient_table(weight)           # (3, width) float32

    tb, lane = _choose_tiles(B, width, jnp.dtype(out_dtype).itemsize)
    grid = (_cdiv(width, lane), _cdiv(B, tb))

    out = pl.pallas_call(
        _block_layer_kernel,
        out_shape=jax.ShapeDtypeStruct((B, width), out_dtype),
        grid=grid,
        in_specs=[
            pl.BlockSpec((tb, 3), lambda n, b: (b, 0)),
            pl.BlockSpec((3, lane), lambda n, b: (0, n)),
        ],
        out_specs=pl.BlockSpec((tb, lane), lambda n, b: (b, n)),
        compiler_params=pltpu.CompilerParams(
            dimension_semantics=("parallel", "parallel"),
            vmem_limit_bytes=_VMEM_LIMIT_BYTES),
    )(x, coeff)

    return out[0] if squeeze else out


def block_layer_reference(x, weight):
    """Pure-JAX reference mirroring the PyTorch forward loop."""
    squeeze = x.ndim == 1
    if squeeze:
        x = x[None, :]
    xf = x.astype(jnp.float32)
    wf = weight.astype(jnp.float32)
    outs = []
    for i in range(weight.shape[0]):
        w = wf[i]
        A = jnp.array(
            [[_softplus(w[0]), w[1], w[2]],
             [0.0, _softplus(w[3]), w[4]],
             [0.0, 0.0, _softplus(w[5])]],
            dtype=jnp.float32,
        )
        blk = (A.T @ A).T
        outs.append(xf @ blk.T)            # F.linear(x, blk)
    out = jnp.concatenate(outs, axis=-1).astype(x.dtype)
    return out[0] if squeeze else out


if __name__ == "__main__":
    in_features = 3          # forward requires in_features == 3
    out_features = 12        # nIntPts = 4
    n_int_pts = out_features // 3
    batch = 8

    key = jax.random.PRNGKey(0)
    kx, kw = jax.random.split(key)

    # kaiming_uniform_(a=sqrt(5)) on (nIntPts, 6) -> U(-1/sqrt(6), 1/sqrt(6))
    fan_in = 6
    bound = 1.0 / math.sqrt(fan_in)
    weight = jax.random.uniform(
        kw, (n_int_pts, 6), dtype=jnp.float32, minval=-bound, maxval=bound)

    x = jax.random.normal(kx, (batch, in_features), dtype=jnp.float32)

    out = jax.block_until_ready(block_layer(x, weight))
    ref = block_layer_reference(x, weight)
    assert out.shape == (batch, out_features)
    assert jnp.allclose(out, ref, atol=1e-5, rtol=1e-5)

    # Also check the 1-D input path.
    out1 = jax.block_until_ready(block_layer(x[0], weight))
    assert out1.shape == (out_features,)
    assert jnp.allclose(out1, block_layer_reference(x[0], weight),
                        atol=1e-5, rtol=1e-5)

    print("KERNEL_OK")
</pallas_src>

<mosaic_0001>
module attributes {stable_mosaic.version = 11 : i64} {
  func.func @_block_layer_kernel(%arg0: i32, %arg1: i32, %arg2: memref<8x3xf32, #tpu.memory_space<vmem>>, %arg3: memref<3x12xf32, #tpu.memory_space<vmem>>, %arg4: memref<8x12xf32, #tpu.memory_space<vmem>>) attributes {dimension_semantics = [#tpu.dimension_semantics<parallel>, #tpu.dimension_semantics<parallel>], iteration_bounds = array<i64: 1, 1>, scalar_prefetch = 0 : i64, scratch_operands = 0 : i64, tpu.core_type = #tpu.core_type<tc>, window_params = [{transform_indices = @transform_0, window_bounds = array<i64: 8, 3>}, {transform_indices = @transform_1, window_bounds = array<i64: 3, 12>}, {transform_indices = @transform_2, window_bounds = array<i64: 8, 12>}]} {
    %c0 = arith.constant 0 : index
    %c0_0 = arith.constant 0 : index
    %0 = vector.load %arg2[%c0, %c0_0] : memref<8x3xf32, #tpu.memory_space<vmem>>, vector<8x3xf32>
    %c0_1 = arith.constant 0 : index
    %c0_2 = arith.constant 0 : index
    %1 = vector.load %arg3[%c0_1, %c0_2] : memref<3x12xf32, #tpu.memory_space<vmem>>, vector<3x12xf32>
    %2 = vector.extract_strided_slice %0 {offsets = [0, 0], sizes = [8, 1], strides = [1, 1]} : vector<8x3xf32> to vector<8x1xf32>
    %3 = vector.extract_strided_slice %1 {offsets = [0, 0], sizes = [1, 12], strides = [1, 1]} : vector<3x12xf32> to vector<1x12xf32>
    %4 = vector.broadcast %2 : vector<8x1xf32> to vector<8x12xf32>
    %5 = vector.broadcast %3 : vector<1x12xf32> to vector<8x12xf32>
    %6 = arith.mulf %4, %5 : vector<8x12xf32>
    %7 = vector.extract_strided_slice %0 {offsets = [0, 1], sizes = [8, 1], strides = [1, 1]} : vector<8x3xf32> to vector<8x1xf32>
    %8 = vector.extract_strided_slice %1 {offsets = [1, 0], sizes = [1, 12], strides = [1, 1]} : vector<3x12xf32> to vector<1x12xf32>
    %9 = vector.broadcast %7 : vector<8x1xf32> to vector<8x12xf32>
    %10 = vector.broadcast %8 : vector<1x12xf32> to vector<8x12xf32>
    %11 = arith.mulf %9, %10 : vector<8x12xf32>
    %12 = arith.addf %6, %11 : vector<8x12xf32>
    %13 = vector.extract_strided_slice %0 {offsets = [0, 2], sizes = [8, 1], strides = [1, 1]} : vector<8x3xf32> to vector<8x1xf32>
    %14 = vector.extract_strided_slice %1 {offsets = [2, 0], sizes = [1, 12], strides = [1, 1]} : vector<3x12xf32> to vector<1x12xf32>
    %15 = vector.broadcast %13 : vector<8x1xf32> to vector<8x12xf32>
    %16 = vector.broadcast %14 : vector<1x12xf32> to vector<8x12xf32>
    %17 = arith.mulf %15, %16 : vector<8x12xf32>
    %18 = arith.addf %12, %17 : vector<8x12xf32>
    %c0_3 = arith.constant 0 : index
    %c0_4 = arith.constant 0 : index
    %19 = vector.load %arg4[%c0_3, %c0_4] : memref<8x12xf32, #tpu.memory_space<vmem>>, vector<8x12xf32>
    tpu.vector_store %arg4[%c0_3, %c0_4], %18 {strides = array<i32>} : memref<8x12xf32, #tpu.memory_space<vmem>>, vector<8x12xf32>,
    return
  }
  func.func @transform_0(%arg0: i32, %arg1: i32) -> (i32, i32) {
    %c0_i32 = arith.constant 0 : i32
    %c0_i32_0 = arith.constant 0 : i32
    return %arg1, %c0_i32 : i32, i32
  }
  func.func @transform_1(%arg0: i32, %arg1: i32) -> (i32, i32) {
    %c0_i32 = arith.constant 0 : i32
    %c0_i32_0 = arith.constant 0 : i32
    return %c0_i32, %arg0 : i32, i32
  }
  func.func @transform_2(%arg0: i32, %arg1: i32) -> (i32, i32) {
    %c0_i32 = arith.constant 0 : i32
    return %arg1, %arg0 : i32, i32
  }
}

</mosaic_0001>

<llo_original>
// kernel: tpu_custom_call.1
$region0: #{tpu_custom_call.1}
  #allocation0 [shape = 'u32[]', space=smem, size = 0x4, offset = 0x4, fixed_abs, tag = 'smem constant byte address 0x4 - core index']
  #allocation1 [shape = 'u32[144,128]{1,0:T(1,128)}', space=vmem, size = 0x12000, scoped, tag = 'internal scratch']
  %s0 = inlined_call_operand.vmem [shape: f32[8,3], index: 0, kind: input, shape index: {}]
  %s1 = inlined_call_operand.vmem [shape: f32[3,12], index: 1, kind: input, shape index: {}]
  %s2 = inlined_call_operand.hbm [shape: f32[8,12], index: 2, kind: output, shape index: {}]
  %s3 = sld [smem:[#allocation0]]
  $region18: #{tpu_custom_call.1} parent=0
    _
  %s5 = ssub.s32 1, %s3
  %s6 = scalar_select 0, %s5, %s3
  $region1: #{tpu_custom_call.1} parent=0
    #allocation2 [shape = 'u8[4096]{0}', space=vmem, size = 0x1000, scoped, tag = 'output window, operand 0, single buffered']
    #allocation3 [shape = 's32[1]{0}', space=sflag, size = 0x4, scoped, tag = 'scoped memory for tpu_custom_call.1']
    %7 = vsyncpa [#allocation3], 0
    // Predicated region
    $region2: #{tpu_custom_call.1} parent=1 // pred_check
      _
    $region3: #{tpu_custom_call.1} parent=1 // pred_check_branch
      %9 = sbr.rel (0) target = $region5
    $region4: #{tpu_custom_call.1} parent=1 // pred_region
      _
    $region5: #{tpu_custom_call.1} parent=1 // pred_fallthru
      _
    // Predicated region
    $region6: #{tpu_custom_call.1} parent=1 // pred_check
      _
    $region7: #{tpu_custom_call.1} parent=1 // pred_check_branch
      %11 = sbr.rel (0) target = $region9
    $region8: #{tpu_custom_call.1} parent=1 // pred_region
      _
    $region9: #{tpu_custom_call.1} parent=1 // pred_fallthru
      _
    %v12 = vld [vmem:[%s0] sm:$0xff]
    %v13 = vld [vmem:[%s1] sm:$0x7]
    %15 = vset.pattern.permute.xlu0 0
    %16 = vperm.xlu0 %15, %v12
    %v17 = vpop.permute.xlu0 %16
    %v19 = vlaneseq
    %v20 = vshrl.u32 %v19, 7
    %v21 = vsub.s32 0, %v20
    %v22 = vrot.slane %v13, %v21
    %v23 = vmul.f32 %v17, %v22
    %24 = vset.pattern.permute.xlu0 1
    %25 = vperm.xlu0 %24, %v12
    %v26 = vpop.permute.xlu0 %25
    %v28 = vlaneseq
    %v29 = vshrl.u32 %v28, 7
    %v30 = vsub.s32 1, %v29
    %v31 = vrot.slane %v13, %v30
    %v32 = vmul.f32 %v26, %v31
    %v33 = vadd.f32 %v23, %v32
    %34 = vset.pattern.permute.xlu0 2
    %35 = vperm.xlu0 %34, %v12
    %v36 = vpop.permute.xlu0 %35
    %v38 = vlaneseq
    %v39 = vshrl.u32 %v38, 7
    %v40 = vsub.s32 2, %v39
    %v41 = vrot.slane %v13, %v40
    %v42 = vmul.f32 %v36, %v41
    %v43 = vadd.f32 %v33, %v42
    %vm44 = vcmask 97280
    %45 = vst.msk [vmem:[#allocation2] sm:$0xff] %vm44, %v43
    // Predicated region
    $region10: #{tpu_custom_call.1} parent=1 // pred_check
      _
    $region11: #{tpu_custom_call.1} parent=1 // pred_check_branch
      %47 = sbr.rel (0) target = $region13
    $region12: #{tpu_custom_call.1} parent=1 // pred_region
      %s49 = ssub.s32 128, 128
      %50 = vsyncadd [#allocation3], %s49
      %s52 = sshll.u32 [#allocation2], 4
      %s53 = int_to_ptr.vmem [resolvable:$true] %s52
      %55 = dma.vmem_to_hbm [thread:$0]  %s53, 128, %s2, [#allocation3]
    $region13: #{tpu_custom_call.1} parent=1 // pred_fallthru
      _
    // Predicated region
    $region14: #{tpu_custom_call.1} parent=1 // pred_check
      _
    $region15: #{tpu_custom_call.1} parent=1 // pred_check_branch
      %57 = sbr.rel (0) target = $region17
    $region16: #{tpu_custom_call.1} parent=1 // pred_region
      %58 = dma.done [#allocation3], 128
    $region17: #{tpu_custom_call.1} parent=1 // pred_fallthru
      _
    %59 = vsyncpa [#allocation3], 1

</llo_original>
